<compile_context>
chip_gen: v6e
topology: v6e:2x2x1
jax: 0.10.0
libtpu: 0.0.40
codegen_flags: <defaults>
</compile_context>

<pallas_src>
import functools

import jax
import jax.numpy as jnp
from jax import lax
from jax.experimental import pallas as pl
from jax.experimental.pallas import tpu as pltpu


def _round_up(x, m):
    return ((x + m - 1) // m) * m


def _ag_alpha_kernel(g_ref, w_ref, alpha_t_ref, *, inv_temperature):
    # --- L2-normalize the tiny, resident op embeddings: one EUP rsqrt -------
    w = w_ref[...].astype(jnp.float32)                            # [K, D]
    o = w * lax.rsqrt(jnp.sum(w * w, axis=-1, keepdims=True))     # [K, D]

    # --- logits^T = o . g^T, both operands contracting on D (attention-score
    # "trans_b" dot; no g transpose materialized).  Output [K, TN]: N on the
    # lane axis so all downstream vector work runs on dense vregs. -----------
    g = g_ref[...].astype(jnp.float32)                            # [TN, D]
    logits = lax.dot_general(
        o, g,
        dimension_numbers=(((1,), (1,)), ((), ())),
        preferred_element_type=jnp.float32,
    ) * inv_temperature                                           # [K, TN]

    # --- softmax over K (sublane axis) + threshold(1/6) + renormalize -------
    # softmax(x)_i > 1/6  <=>  6*e_i > sum(e); the softmax denominator cancels
    # against the post-threshold renormalization, so a single exact division
    # suffices and the threshold decision never touches a reciprocal.
    m = jnp.max(logits, axis=0, keepdims=True)                    # [1, TN]
    e = jnp.exp(logits - m)                                       # [K, TN]
    s = jnp.sum(e, axis=0, keepdims=True)                         # [1, TN]
    masked = jnp.where(e * 6.0 > s, e, 0.0)                       # [K, TN]
    denom = jnp.sum(masked, axis=0, keepdims=True)                # [1, TN]
    # NOTE: if all K softmax entries are exactly 1/6, the strict threshold
    # zeroes the whole column and this yields 0/0 -> NaN, matching PyTorch.
    alpha_t_ref[...] = (masked / denom).astype(alpha_t_ref.dtype)


def ag_layer(g, op_emb_weight, temperature, *, block_n=8192):
    """Pallas implementation of AGLayer.forward.

    Args:
      g:             [N, graph_dim] float32 or bfloat16 (upcast in-kernel).
      op_emb_weight: [num_op, graph_dim] (nn.Embedding weight).
      temperature:   python float (args.temperature).
      block_n:       max row-tile size (multiple of 128).

    Returns:
      (alpha [N, num_op] float32, cosloss scalar float32)
    """
    n, d = g.shape
    k, d2 = op_emb_weight.shape
    assert d == d2
    assert block_n % 128 == 0

    # cosloss = sum_{i,j} o_i . o_j = ||sum_i o_i||^2 on the tiny [K, D] weight.
    # Hoisted out of the per-row-tile kernel loop (it is independent of g).
    w32 = op_emb_weight.astype(jnp.float32)
    o = w32 * lax.rsqrt(jnp.sum(w32 * w32, axis=-1, keepdims=True))
    col = jnp.sum(o, axis=0)
    cosloss = jnp.sum(col * col)

    # Row tiling:
    #  * small N: one full-array block (launch-latency bound anyway);
    #  * larger N: lane-aligned (x128) tiles, at least two so the "parallel"
    #    grid axis can be sharded across TensorCores on v7x, capped at block_n
    #    to keep double-buffered VMEM (~1 KiB/row) well inside the scoped limit.
    if n <= 1024:
        tn = n
    else:
        tn = min(block_n, _round_up(pl.cdiv(n, 2), 128))
    grid = (pl.cdiv(n, tn),)

    kernel = functools.partial(
        _ag_alpha_kernel, inv_temperature=1.0 / float(temperature))

    alpha_t = pl.pallas_call(
        kernel,
        out_shape=jax.ShapeDtypeStruct((k, n), jnp.float32),
        grid_spec=pltpu.PrefetchScalarGridSpec(
            num_scalar_prefetch=0,
            grid=grid,
            in_specs=[
                pl.BlockSpec((tn, d), lambda i: (i, 0)),   # g row tile
                pl.BlockSpec((k, d), lambda i: (0, 0)),    # op weights, resident
            ],
            out_specs=pl.BlockSpec((k, tn), lambda i: (0, i)),  # alpha^T tile
        ),
        compiler_params=pltpu.CompilerParams(
            # Row tiles are independent -> megacore sharding on v7x; harmless
            # on single-TC v5e/v6e.
            dimension_semantics=("parallel",),
            vmem_limit_bytes=32 * 1024 * 1024,
        ),
    )(g, op_emb_weight)

    # Cheap [K, N] -> [N, K] flip (24N bytes vs the 128N-byte g read) to keep
    # the module's return layout.
    return alpha_t.T, cosloss


if __name__ == "__main__":
    key = jax.random.PRNGKey(0)
    k_g, k_w = jax.random.split(key)

    num_op = 6        # threshold 1/6 in the module implies 6 candidate ops
    graph_dim = 32
    n_graphs = 8
    temperature = 0.2

    # Deterministic "parameter" init for nn.Embedding(num_op, graph_dim)
    op_emb_weight = jax.random.normal(k_w, (num_op, graph_dim), dtype=jnp.float32)
    g = jax.random.normal(k_g, (n_graphs, graph_dim), dtype=jnp.float32)

    alpha, cosloss = ag_layer(g, op_emb_weight, temperature)
    jax.block_until_ready((alpha, cosloss))

    # Pure-JAX reference check (mirrors the PyTorch module)
    o_ref = op_emb_weight / jnp.linalg.norm(op_emb_weight, axis=-1, keepdims=True)
    cos_ref = jnp.sum(o_ref @ o_ref.T)
    a = jax.nn.softmax((g @ o_ref.T) / temperature, axis=1)
    a = a * (a > 1.0 / 6.0)
    a = a / jnp.sum(a, axis=1, keepdims=True)

    assert alpha.shape == (n_graphs, num_op)
    assert jnp.allclose(alpha, a, atol=1e-4, rtol=1e-4), "alpha mismatch"
    assert jnp.allclose(cosloss, cos_ref, atol=1e-3, rtol=1e-4), "cosloss mismatch"

    print("KERNEL_OK")
</pallas_src>

<mosaic_0001>
module attributes {stable_mosaic.version = 11 : i64} {
  func.func @_ag_alpha_kernel(%arg0: i32, %arg1: memref<8x32xf32, #tpu.memory_space<vmem>>, %arg2: memref<6x32xf32, #tpu.memory_space<vmem>>, %arg3: memref<6x8xf32, #tpu.memory_space<vmem>>) attributes {dimension_semantics = [#tpu.dimension_semantics<parallel>], iteration_bounds = array<i64: 1>, scalar_prefetch = 0 : i64, scratch_operands = 0 : i64, tpu.core_type = #tpu.core_type<tc>, window_params = [{transform_indices = @transform_0, window_bounds = array<i64: 8, 32>}, {pipeline_mode = #tpu.pipeline_mode<synchronous>, transform_indices = @transform_1, window_bounds = array<i64: 6, 32>}, {transform_indices = @transform_2, window_bounds = array<i64: 6, 8>}]} {
    %c0 = arith.constant 0 : index
    %c0_0 = arith.constant 0 : index
    %0 = vector.load %arg2[%c0, %c0_0] : memref<6x32xf32, #tpu.memory_space<vmem>>, vector<6x32xf32>
    %1 = arith.mulf %0, %0 : vector<6x32xf32>
    %cst = arith.constant dense<0.000000e+00> : vector<6xf32>
    %2 = vector.multi_reduction <add>, %1, %cst [1] : vector<6x32xf32> to vector<6xf32>
    %3 = vector.shape_cast %2 : vector<6xf32> to vector<6x1xf32>
    %4 = math.rsqrt %3 : vector<6x1xf32>
    %5 = vector.broadcast %4 : vector<6x1xf32> to vector<6x32xf32>
    %6 = arith.mulf %0, %5 : vector<6x32xf32>
    %c0_1 = arith.constant 0 : index
    %c0_2 = arith.constant 0 : index
    %7 = vector.load %arg1[%c0_1, %c0_2] : memref<8x32xf32, #tpu.memory_space<vmem>>, vector<8x32xf32>
    %cst_3 = arith.constant dense<0.000000e+00> : vector<6x8xf32>
    %8 = tpu.matmul %6, %7, %cst_3 {dimension_numbers = #tpu.dot_dimension_numbers<[1], [1], [0], [0], [0, 0, 1, 0], [], []>} : vector<6x32xf32>, vector<8x32xf32>, vector<6x8xf32> -> vector<6x8xf32>
    %cst_4 = arith.constant 5.000000e+00 : f32
    %9 = vector.broadcast %cst_4 : f32 to vector<6x8xf32>
    %10 = arith.mulf %8, %9 : vector<6x8xf32>
    %cst_5 = arith.constant dense<0xFF800000> : vector<8xf32>
    %11 = vector.multi_reduction <maximumf>, %10, %cst_5 [0] : vector<6x8xf32> to vector<8xf32>
    %12 = vector.shape_cast %11 : vector<8xf32> to vector<1x8xf32>
    %13 = vector.broadcast %12 : vector<1x8xf32> to vector<6x8xf32>
    %14 = arith.subf %10, %13 : vector<6x8xf32>
    %15 = math.exp %14 : vector<6x8xf32>
    %cst_6 = arith.constant dense<0.000000e+00> : vector<8xf32>
    %16 = vector.multi_reduction <add>, %15, %cst_6 [0] : vector<6x8xf32> to vector<8xf32>
    %17 = vector.shape_cast %16 : vector<8xf32> to vector<1x8xf32>
    %cst_7 = arith.constant 6.000000e+00 : f32
    %18 = vector.broadcast %cst_7 : f32 to vector<6x8xf32>
    %19 = arith.mulf %15, %18 : vector<6x8xf32>
    %20 = vector.broadcast %17 : vector<1x8xf32> to vector<6x8xf32>
    %21 = arith.cmpf ogt, %19, %20 : vector<6x8xf32>
    %cst_8 = arith.constant 0.000000e+00 : f32
    %22 = vector.broadcast %cst_8 : f32 to vector<6x8xf32>
    %23 = arith.select %21, %15, %22 : vector<6x8xi1>, vector<6x8xf32>
    %cst_9 = arith.constant dense<0.000000e+00> : vector<8xf32>
    %24 = vector.multi_reduction <add>, %23, %cst_9 [0] : vector<6x8xf32> to vector<8xf32>
    %25 = vector.shape_cast %24 : vector<8xf32> to vector<1x8xf32>
    %26 = vector.broadcast %25 : vector<1x8xf32> to vector<6x8xf32>
    %27 = arith.divf %23, %26 : vector<6x8xf32>
    %c0_10 = arith.constant 0 : index
    %c0_11 = arith.constant 0 : index
    %28 = vector.load %arg3[%c0_10, %c0_11] : memref<6x8xf32, #tpu.memory_space<vmem>>, vector<6x8xf32>
    tpu.vector_store %arg3[%c0_10, %c0_11], %27 {strides = array<i32>} : memref<6x8xf32, #tpu.memory_space<vmem>>, vector<6x8xf32>,
    return
  }
  func.func @transform_0(%arg0: i32) -> (i32, i32) {
    %c0_i32 = arith.constant 0 : i32
    %c0_i32_0 = arith.constant 0 : i32
    return %arg0, %c0_i32 : i32, i32
  }
  func.func @transform_1(%arg0: i32) -> (i32, i32) {
    %c0_i32 = arith.constant 0 : i32
    %c0_i32_0 = arith.constant 0 : i32
    %c0_i32_1 = arith.constant 0 : i32
    return %c0_i32, %c0_i32_0 : i32, i32
  }
  func.func @transform_2(%arg0: i32) -> (i32, i32) {
    %c0_i32 = arith.constant 0 : i32
    %c0_i32_0 = arith.constant 0 : i32
    return %c0_i32, %arg0 : i32, i32
  }
}

</mosaic_0001>

<llo_original>
// kernel: tpu_custom_call.1
$region0: #{tpu_custom_call.1}
  #allocation0 [shape = 'u32[]', space=smem, size = 0x4, offset = 0x4, fixed_abs, tag = 'smem constant byte address 0x4 - core index']
  #allocation1 [shape = 'u32[144,128]{1,0:T(1,128)}', space=vmem, size = 0x12000, scoped, tag = 'internal scratch']
  %s0 = inlined_call_operand.hbm [shape: f32[8,32], index: 0, kind: input, shape index: {}]
  %s1 = inlined_call_operand.hbm [shape: f32[6,32], index: 1, kind: input, shape index: {}]
  %s2 = inlined_call_operand.hbm [shape: f32[6,8], index: 2, kind: output, shape index: {}]
  %s3 = sld [smem:[#allocation0]]
  $region26: #{tpu_custom_call.1} parent=0
    _
  %s5 = ssub.s32 1, %s3
  %s6 = scalar_select 0, %s5, %s3
  $region1: #{tpu_custom_call.1} parent=0
    #allocation2 [shape = 'u8[4096]{0}', space=vmem, size = 0x1000, scoped, tag = 'input window, operand 0, single buffered']
    #allocation3 [shape = 's32[1]{0}', space=sflag, size = 0x4, scoped, tag = 'scoped memory for tpu_custom_call.1']
    #allocation4 [shape = 's32[1]{0}', space=sflag, size = 0x4, scoped, tag = 'scoped memory for tpu_custom_call.1']
    #allocation5 [shape = 'u8[4096]{0}', space=vmem, size = 0x1000, scoped, tag = 'input window, operand 1, single buffered']
    #allocation6 [shape = 's32[1]{0}', space=sflag, size = 0x4, scoped, tag = 'scoped memory for tpu_custom_call.1']
    #allocation7 [shape = 'u8[4096]{0}', space=vmem, size = 0x1000, scoped, tag = 'output window, operand 0, single buffered']
    %7 = vsyncpa [#allocation3], 0
    %8 = vsyncpa [#allocation6], 0
    %9 = vsyncpa [#allocation4], 0
    // Predicated region
    $region2: #{tpu_custom_call.1} parent=1 // pred_check
      _
    $region3: #{tpu_custom_call.1} parent=1 // pred_check_branch
      %11 = sbr.rel (0) target = $region5
    $region4: #{tpu_custom_call.1} parent=1 // pred_region
      %s13 = ssub.s32 128, 128
      %14 = vsyncadd [#allocation3], %s13
      %s16 = sshll.u32 [#allocation2], 4
      %s17 = int_to_ptr.vmem [resolvable:$true] %s16
      %19 = dma.hbm_to_vmem [thread:$0]  %s0, 128, %s17, [#allocation3]
    $region5: #{tpu_custom_call.1} parent=1 // pred_fallthru
      _
    // Predicated region
    $region6: #{tpu_custom_call.1} parent=1 // pred_check
      _
    $region7: #{tpu_custom_call.1} parent=1 // pred_check_branch
      %21 = sbr.rel (0) target = $region9
    $region8: #{tpu_custom_call.1} parent=1 // pred_region
      %s23 = ssub.s32 128, 128
      %24 = vsyncadd [#allocation6], %s23
      %s26 = sshll.u32 [#allocation5], 4
      %s27 = int_to_ptr.vmem [resolvable:$true] %s26
      %29 = dma.hbm_to_vmem [thread:$0]  %s1, 128, %s27, [#allocation6]
    $region9: #{tpu_custom_call.1} parent=1 // pred_fallthru
      _
    // Predicated region
    $region10: #{tpu_custom_call.1} parent=1 // pred_check
      _
    $region11: #{tpu_custom_call.1} parent=1 // pred_check_branch
      %31 = sbr.rel (0) target = $region13
    $region12: #{tpu_custom_call.1} parent=1 // pred_region
      %32 = dma.done [#allocation3], 128
    $region13: #{tpu_custom_call.1} parent=1 // pred_fallthru
      _
    // Predicated region
    $region14: #{tpu_custom_call.1} parent=1 // pred_check
      _
    $region15: #{tpu_custom_call.1} parent=1 // pred_check_branch
      %34 = sbr.rel (0) target = $region17
    $region16: #{tpu_custom_call.1} parent=1 // pred_region
      %35 = dma.done [#allocation6], 128
    $region17: #{tpu_custom_call.1} parent=1 // pred_fallthru
      _
    %v36 = vld [vmem:[#allocation5] sm:$0x3f]
    %v37 = vmul.f32 %v36, %v36
    %vm38 = vcmask 259072
    %v39 = vsel %vm38, %v37, 0.0
    %40 = vadd.xlane.f32.xlu0 %v39
    %v41 = vpop.xlane.xlu0 %40
    %v42 = vrsqrt.pop %v41
    %v43 = vmul.f32 %v36, %v42
    %v44 = vld [vmem:[#allocation2] sm:$0xff]
    %vm45 = vcmask 261120
    %v47 = vsel %vm45, %v43, 0
    %v50 = vsel %vm45, %v44, 0
    %52 = vmatprep.subr.mxu0 0.0
    %53 = vmatpush1.xpose.msra.mxu0 0.0
    %54 = vmatprep.subr.mxu0 0.0
    %55 = vmatpush1.xpose.msra.mxu0 0.0
    %56 = vmatprep.subr.mxu0 0.0
    %57 = vmatpush1.xpose.msra.mxu0 0.0
    %58 = vmatprep.subr.mxu0 0.0
    %59 = vmatpush1.xpose.msra.mxu0 0.0
    %60 = vmatprep.subr.mxu0 0.0
    %61 = vmatpush1.xpose.msra.mxu0 0.0
    %62 = vmatprep.subr.mxu0 0.0
    %63 = vmatpush1.xpose.msra.mxu0 0.0
    %64 = vmatprep.subr.mxu0 0.0
    %65 = vmatpush1.xpose.msra.mxu0 0.0
    %66 = vmatprep.subr.mxu0 0.0
    %67 = vmatpush1.xpose.msra.mxu0 0.0
    %68 = vmatprep.subr.mxu0 0.0
    %69 = vmatpush1.xpose.msra.mxu0 0.0
    %70 = vmatprep.subr.mxu0 0.0
    %71 = vmatpush1.xpose.msra.mxu0 0.0
    %72 = vmatprep.subr.mxu0 0.0
    %73 = vmatpush1.xpose.msra.mxu0 0.0
    %74 = vmatprep.subr.mxu0 0.0
    %75 = vmatpush1.xpose.msra.mxu0 0.0
    %76 = vmatprep.subr.mxu0 0.0
    %77 = vmatpush1.xpose.msra.mxu0 0.0
    %78 = vmatprep.subr.mxu0 0.0
    %79 = vmatpush1.xpose.msra.mxu0 0.0
    %80 = vmatprep.subr.mxu0 0.0
    %81 = vmatpush1.xpose.msra.mxu0 0.0
    %82 = vmatprep.subr.mxu0 0.0
    %83 = vmatpush1.xpose.msra.mxu0 %v50
    %84 = vmatprep.subr.mxu0 0.0
    %85 = vmatpush2.xpose.msra.mxu0 0.0
    %86 = vmatprep.subr.mxu0 0.0
    %87 = vmatpush2.xpose.msra.mxu0 0.0
    %88 = vmatprep.subr.mxu0 0.0
    %89 = vmatpush2.xpose.msra.mxu0 0.0
    %90 = vmatprep.subr.mxu0 0.0
    %91 = vmatpush2.xpose.msra.mxu0 0.0
    %92 = vmatprep.subr.mxu0 0.0
    %93 = vmatpush2.xpose.msra.mxu0 0.0
    %94 = vmatprep.subr.mxu0 0.0
    %95 = vmatpush2.xpose.msra.mxu0 0.0
    %96 = vmatprep.subr.mxu0 0.0
    %97 = vmatpush2.xpose.msra.mxu0 0.0
    %98 = vmatprep.subr.mxu0 0.0
    %99 = vmatpush2.xpose.msra.mxu0 0.0
    %100 = vmatprep.subr.mxu0 0.0
    %101 = vmatpush2.xpose.msra.mxu0 0.0
    %102 = vmatprep.subr.mxu0 0.0
    %103 = vmatpush2.xpose.msra.mxu0 0.0
    %104 = vmatprep.subr.mxu0 0.0
    %105 = vmatpush2.xpose.msra.mxu0 0.0
    %106 = vmatprep.subr.mxu0 0.0
    %107 = vmatpush2.xpose.msra.mxu0 0.0
    %108 = vmatprep.subr.mxu0 0.0
    %109 = vmatpush2.xpose.msra.mxu0 0.0
    %110 = vmatprep.subr.mxu0 0.0
    %111 = vmatpush2.xpose.msra.mxu0 0.0
    %112 = vmatprep.subr.mxu0 0.0
    %113 = vmatpush2.xpose.msra.mxu0 0.0
    %114 = vmatprep.subr.mxu0 0.0
    %115 = vmatpush2.xpose.msra.mxu0 0.0
    %116 = vmatprep.mubr.f32.mxu0 0.0
    %117 = vmatmul.mubr.f32.gmra.mxu0 %v47
    %v118 = vpop.f32.mrf.mxu0
    %v119 = vadd.f32 0.0, %v118
    %v120 = vpop.f32.mrf.mxu0
    %121 = vdwg.mxu0
    %v122 = vmul.f32 %v119, 5.0
    %vm123 = vcmask 62464
    %v124 = vsel %vm123, %v122, -inf
    %v125 = vrot.slane %v124, 4
    %v126 = vmax.f32 %v124, %v125
    %v127 = vrot.slane %v126, 2
    %v128 = vmax.f32 %v126, %v127
    %v129 = vrot.slane %v128, 1
    %v130 = vmax.f32 %v128, %v129
    %v131 = vsub.f32 %v122, %v130
    %v132 = vmul.f32 %v131, 1.442695
    %v133 = vpow.pop %v132
    %v134 = vsel %vm123, %v133, 0.0
    %v135 = vrot.slane %v134, 4
    %v136 = vadd.f32 %v134, %v135
    %v137 = vrot.slane %v136, 2
    %v138 = vadd.f32 %v136, %v137
    %v139 = vrot.slane %v138, 1
    %v140 = vadd.f32 %v138, %v139
    %v141 = vmul.f32 %v133, 6.0
    %vm142 = vcmp.gt.f32.partialorder %v141, %v140
    %v143 = vsel %vm142, %v133, 0.0
    %v144 = vsel %vm123, %v143, 0.0
    %v145 = vrot.slane %v144, 4
    %v146 = vadd.f32 %v144, %v145
    %v147 = vrot.slane %v146, 2
    %v148 = vadd.f32 %v146, %v147
    %v149 = vrot.slane %v148, 1
    %v150 = vadd.f32 %v148, %v149
    %v151 = vrcp.pop %v150
    %v152 = vmul.f32 %v143, %v151
    %153 = vst.msk [vmem:[#allocation7] sm:$0x3f] %vm123, %v152
    // Predicated region
    $region18: #{tpu_custom_call.1} parent=1 // pred_check
      _
    $region19: #{tpu_custom_call.1} parent=1 // pred_check_branch
      %155 = sbr.rel (0) target = $region21
    $region20: #{tpu_custom_call.1} parent=1 // pred_region
      %s157 = ssub.s32 128, 128
      %158 = vsyncadd [#allocation4], %s157
      %s160 = sshll.u32 [#allocation7], 4
      %s161 = int_to_ptr.vmem [resolvable:$true] %s160
      %163 = dma.vmem_to_hbm [thread:$0]  %s161, 128, %s2, [#allocation4]
    $region21: #{tpu_custom_call.1} parent=1 // pred_fallthru
      _
    // Predicated region
    $region22: #{tpu_custom_call.1} parent=1 // pred_check
      _
    $region23: #{tpu_custom_call.1} parent=1 // pred_check_branch
      %165 = sbr.rel (0) target = $region25
    $region24: #{tpu_custom_call.1} parent=1 // pred_region
      %166 = dma.done [#allocation4], 128
    $region25: #{tpu_custom_call.1} parent=1 // pred_fallthru
      _
    %167 = vsyncpa [#allocation3], 1
    %168 = vsyncpa [#allocation6], 1
    %169 = vsyncpa [#allocation4], 1

</llo_original>
